<compile_context>
chip_gen: v7x
topology: tpu7x:2x2x1
jax: 0.10.0
libtpu: 0.0.40
codegen_flags: <defaults>
</compile_context>

<pallas_src>
import jax
import jax.numpy as jnp
from jax.experimental import pallas as pl
from jax.experimental.pallas import tpu as pltpu

_LANE = 128                    # lane width (minor VMEM dim pads to this)
_UNIT = 256                    # batch-tile granularity (multiple of the 8-sublane rule)
_VMEM_TILE_BUDGET = 24 << 20   # keep the per-step footprint comfortable even on v7x (64 MiB)

_ACTIVATIONS = {
    "relu": lambda v: jnp.maximum(v, 0.0),
    "tanh": jnp.tanh,
    "sigmoid": jax.nn.sigmoid,
    "identity": lambda v: v,
}


def _round_up(n, m):
    return ((n + m - 1) // m) * m


def _cdiv(a, b):
    return -(-a // b)


# ---------------- tiling / VMEM sizing ----------------
def _vmem_bytes(bt, dims, in_isz, mm_isz, out_isz):
    """Conservative lane-padded VMEM footprint of one pipeline step (all temps live)."""
    lp = lambda d: _round_up(d, _LANE)
    total = 2 * bt * lp(dims[0]) * in_isz        # double-buffered x tiles
    total += 2 * bt * lp(dims[-1]) * out_isz     # double-buffered out tiles
    total += bt * lp(dims[0]) * mm_isz           # x cast to matmul dtype
    for d in dims[1:]:
        total += bt * lp(d) * (4 + mm_isz)       # f32 accumulator + matmul-dtype copy
    return total


def _pick_batch_tile(B, batch_tile, dims, in_isz, mm_isz, out_isz):
    bt = max(_UNIT, min(_round_up(batch_tile, _UNIT), _round_up(B, _UNIT)))
    # clamp so the lane-padded footprint fits the budget on every generation
    while bt > _UNIT and _vmem_bytes(bt, dims, in_isz, mm_isz, out_isz) > _VMEM_TILE_BUDGET:
        bt = max(_UNIT, _round_up(bt // 2, _UNIT))
    # v7x dual TensorCore: prefer an even step count >= 2 when the batch allows,
    # otherwise keep the tile as large as possible (amortizes per-step overhead).
    n = _cdiv(B, bt)
    if n == 1 and B > _UNIT:
        bt = max(_UNIT, _round_up(_cdiv(B, 2), _UNIT))
        n = _cdiv(B, bt)
    if n > 1 and n % 2 == 1:
        bt_even = max(_UNIT, _round_up(_cdiv(B, n + 1), _UNIT))
        if _cdiv(B, bt_even) % 2 == 0:
            bt = bt_even
            n = _cdiv(B, bt)
    return bt, n * bt, n


# ---------------- Pallas kernel (built per configuration, fully fused) ----------------
def _make_mlp_kernel(num_hidden, act_names, mm_dtype):
    acts = [_ACTIVATIONS[name] for name in act_names]

    def kernel(x_ref, *refs):
        o_ref = refs[-1]
        wb = refs[:-1]                                   # w0, b0, w1, b1, ..., wF, bF
        h = x_ref[...].astype(mm_dtype)                  # in-VMEM cast to MXU operand dtype
        for li in range(num_hidden):
            w_ref, b_ref = wb[2 * li], wb[2 * li + 1]
            z = jnp.dot(h, w_ref[...], preferred_element_type=jnp.float32)   # MXU, f32 acc
            z = acts[li](z + b_ref[...])                 # f32 bias + activation (VPU/EUP)
            # Dropout(p=0.5): identity in eval mode.
            h = z.astype(mm_dtype)
        wf_ref, bf_ref = wb[-2], wb[-1]
        y = jnp.dot(h, wf_ref[...], preferred_element_type=jnp.float32)
        o_ref[...] = jax.nn.sigmoid(y + bf_ref[...]).astype(o_ref.dtype)

    return kernel


# ---------------- wrapper ----------------
def sc_up_fc_nn_forward(x, params, activations, *, batch_tile=4096,
                        use_bf16_matmul=True, out_dtype=jnp.float32):
    """Fused forward pass of sc_up_fc_nn (eval mode).

    x: (B, input_dim).
    params: [(w, b), ...] in PyTorch nn.Linear layout -- w: (out, in), b: (out,) or (out, 1).
            len(params) == len(activations) + 1; the last entry is final_linear.
    activations: names of the hidden-layer activations ('relu', 'tanh', 'sigmoid', 'identity').
    """
    num_hidden = len(activations)
    assert len(params) == num_hidden + 1, "need one (w, b) per hidden layer plus final_linear"
    for name in activations:
        assert name in _ACTIVATIONS, f"unsupported activation: {name}"

    B, din = x.shape
    dims = [din] + [w.shape[0] for (w, _) in params]          # [din, h0, ..., dout]
    for li, (w, b) in enumerate(params):
        assert w.shape == (dims[li + 1], dims[li]), f"layer {li} weight shape mismatch"
        assert b.shape in ((dims[li + 1],), (dims[li + 1], 1)), f"layer {li} bias shape mismatch"
    dout = dims[-1]

    mm_dtype = jnp.bfloat16 if use_bf16_matmul else jnp.float32
    in_isz = jnp.dtype(x.dtype).itemsize
    mm_isz = jnp.dtype(mm_dtype).itemsize
    out_isz = jnp.dtype(out_dtype).itemsize

    bt, B_pad, n_steps = _pick_batch_tile(B, batch_tile, dims, in_isz, mm_isz, out_isz)

    # Ragged batch: zero-pad to a whole number of tiles (no-op when already aligned).
    # Padded rows flow through the activations (finite with zero pad) and are sliced off.
    x_in = x if B_pad == B else jnp.pad(x, ((0, B_pad - B), (0, 0)))

    # Weights -> (in, out), biases -> (1, out): tiny, batch-independent conversions.
    flat = []
    for (w, b) in params:
        flat.append(jnp.asarray(w, mm_dtype).T)
        flat.append(jnp.asarray(b, jnp.float32).reshape(1, -1))

    in_specs = [pl.BlockSpec((bt, din), lambda i: (i, 0))]     # x tile (batch on sublanes)
    for (w, _) in params:
        o, i_ = w.shape
        in_specs.append(pl.BlockSpec((i_, o), lambda i: (0, 0)))   # resident weight (in, out)
        in_specs.append(pl.BlockSpec((1, o), lambda i: (0, 0)))    # resident bias (1, out)

    # VMEM limit = real lane-padded footprint + resident weights + small headroom.
    vmem_limit = _vmem_bytes(bt, dims, in_isz, mm_isz, out_isz)
    vmem_limit += 2 * sum(_round_up(w.shape[0], _LANE) * (w.shape[1] * mm_isz + 8 * 4)
                          for (w, _) in params)
    vmem_limit = int(max(vmem_limit + (4 << 20), 16 << 20))

    out_pad = pl.pallas_call(
        _make_mlp_kernel(num_hidden, list(activations), mm_dtype),
        out_shape=jax.ShapeDtypeStruct((B_pad, dout), out_dtype),
        grid_spec=pltpu.PrefetchScalarGridSpec(
            num_scalar_prefetch=0,
            grid=(n_steps,),
            in_specs=in_specs,
            out_specs=pl.BlockSpec((bt, dout), lambda i: (i, 0)),
        ),
        compiler_params=pltpu.CompilerParams(
            dimension_semantics=("parallel",),
            vmem_limit_bytes=vmem_limit,
        ),
    )(x_in, *flat)

    return out_pad if B_pad == B else out_pad[:B]


# ---------------- deterministic parameter init (mimics nn.Linear default init) ----------------
def init_linear(key, fan_in, fan_out):
    kw, kb = jax.random.split(key)
    bound = 1.0 / jnp.sqrt(jnp.float32(fan_in))
    w = jax.random.uniform(kw, (fan_out, fan_in), jnp.float32, -bound, bound)  # (out, in)
    b = jax.random.uniform(kb, (fan_out,), jnp.float32, -bound, bound)         # (out,)
    return w, b


def reference_forward(x, params, activations):
    """Plain-JAX reference matching the PyTorch module (eval mode)."""
    h = x
    for (w, b), name in zip(params[:-1], activations):
        h = _ACTIVATIONS[name](h @ w.T + b.reshape(1, -1))
    wf, bf = params[-1]
    return jax.nn.sigmoid(h @ wf.T + bf.reshape(1, -1))


if __name__ == "__main__":
    # Configuration consistent with the module:
    #   sc_up_fc_nn(input_dim=32, output_dim=16,
    #               hidden_dim_array=[64, 32], functions_array=[nn.ReLU, nn.Tanh])
    B, INPUT_DIM, OUTPUT_DIM = 8, 32, 16
    HIDDEN = [64, 32]
    ACTS = ["relu", "tanh"]

    key = jax.random.PRNGKey(0)
    k_x, k1, k2, k3 = jax.random.split(key, 4)

    x = jax.random.normal(k_x, (B, INPUT_DIM), jnp.float32)
    params = [
        init_linear(k1, INPUT_DIM, HIDDEN[0]),
        init_linear(k2, HIDDEN[0], HIDDEN[1]),
        init_linear(k3, HIDDEN[1], OUTPUT_DIM),
    ]
    ref = reference_forward(x, params, ACTS)

    # f32 matmul path (tight numerics)
    out_f32 = jax.block_until_ready(
        sc_up_fc_nn_forward(x, params, ACTS, use_bf16_matmul=False))
    assert out_f32.shape == (B, OUTPUT_DIM) and out_f32.dtype == jnp.float32
    assert jnp.allclose(out_f32, ref, atol=1e-4, rtol=1e-3), float(jnp.max(jnp.abs(out_f32 - ref)))

    # bf16 MXU-operand path (MXU-native on v5e/v6e/v7x); accumulation + activations stay f32.
    out_bf16 = jax.block_until_ready(
        sc_up_fc_nn_forward(x, params, ACTS, use_bf16_matmul=True))
    assert out_bf16.shape == (B, OUTPUT_DIM)
    assert jnp.allclose(out_bf16, ref, atol=2e-2, rtol=2e-2)

    # Optional bf16 output (halves store traffic); math unchanged.
    out_b16 = jax.block_until_ready(
        sc_up_fc_nn_forward(x, params, ACTS, use_bf16_matmul=True, out_dtype=jnp.bfloat16))
    assert out_b16.dtype == jnp.bfloat16
    assert jnp.allclose(out_b16.astype(jnp.float32), ref, atol=3e-2, rtol=3e-2)

    # Ragged batch across a multi-step (even, v7x-friendly) grid.
    B2 = 1000
    x2 = jax.random.normal(jax.random.PRNGKey(1), (B2, INPUT_DIM), jnp.float32)
    out2 = jax.block_until_ready(
        sc_up_fc_nn_forward(x2, params, ACTS, use_bf16_matmul=False))
    assert out2.shape == (B2, OUTPUT_DIM)
    assert jnp.allclose(out2, reference_forward(x2, params, ACTS), atol=1e-4, rtol=1e-3)

    print("KERNEL_OK")
</pallas_src>

<mosaic_0001>
module attributes {stable_mosaic.version = 11 : i64} {
  func.func @kernel(%arg0: i32, %arg1: memref<256x32xf32, #tpu.memory_space<vmem>>, %arg2: memref<32x64xf32, #tpu.memory_space<vmem>>, %arg3: memref<1x64xf32, #tpu.memory_space<vmem>>, %arg4: memref<64x32xf32, #tpu.memory_space<vmem>>, %arg5: memref<1x32xf32, #tpu.memory_space<vmem>>, %arg6: memref<32x16xf32, #tpu.memory_space<vmem>>, %arg7: memref<1x16xf32, #tpu.memory_space<vmem>>, %arg8: memref<256x16xf32, #tpu.memory_space<vmem>>) attributes {dimension_semantics = [#tpu.dimension_semantics<parallel>], iteration_bounds = array<i64: 1>, scalar_prefetch = 0 : i64, scratch_operands = 0 : i64, tpu.core_type = #tpu.core_type<tc>, window_params = [{transform_indices = @transform_0, window_bounds = array<i64: 256, 32>}, {pipeline_mode = #tpu.pipeline_mode<synchronous>, transform_indices = @transform_1, window_bounds = array<i64: 32, 64>}, {pipeline_mode = #tpu.pipeline_mode<synchronous>, transform_indices = @transform_2, window_bounds = array<i64: 1, 64>}, {pipeline_mode = #tpu.pipeline_mode<synchronous>, transform_indices = @transform_3, window_bounds = array<i64: 64, 32>}, {pipeline_mode = #tpu.pipeline_mode<synchronous>, transform_indices = @transform_4, window_bounds = array<i64: 1, 32>}, {pipeline_mode = #tpu.pipeline_mode<synchronous>, transform_indices = @transform_5, window_bounds = array<i64: 32, 16>}, {pipeline_mode = #tpu.pipeline_mode<synchronous>, transform_indices = @transform_6, window_bounds = array<i64: 1, 16>}, {transform_indices = @transform_7, window_bounds = array<i64: 256, 16>}]} {
    %c0 = arith.constant 0 : index
    %c0_0 = arith.constant 0 : index
    %0 = vector.load %arg1[%c0, %c0_0] : memref<256x32xf32, #tpu.memory_space<vmem>>, vector<256x32xf32>
    %c0_1 = arith.constant 0 : index
    %c0_2 = arith.constant 0 : index
    %1 = vector.load %arg2[%c0_1, %c0_2] : memref<32x64xf32, #tpu.memory_space<vmem>>, vector<32x64xf32>
    %cst = arith.constant dense<0.000000e+00> : vector<256x64xf32>
    %2 = tpu.matmul %0, %1, %cst {dimension_numbers = #tpu.dot_dimension_numbers<[1], [0], [0], [1], [0, 0, 1, 1], [], []>} : vector<256x32xf32>, vector<32x64xf32>, vector<256x64xf32> -> vector<256x64xf32>
    %c0_3 = arith.constant 0 : index
    %c0_4 = arith.constant 0 : index
    %3 = vector.load %arg3[%c0_3, %c0_4] : memref<1x64xf32, #tpu.memory_space<vmem>>, vector<1x64xf32>
    %4 = vector.broadcast %3 : vector<1x64xf32> to vector<256x64xf32>
    %5 = arith.addf %2, %4 : vector<256x64xf32>
    %cst_5 = arith.constant 0.000000e+00 : f32
    %6 = vector.broadcast %cst_5 : f32 to vector<256x64xf32>
    %7 = arith.maximumf %5, %6 : vector<256x64xf32>
    %c0_6 = arith.constant 0 : index
    %c0_7 = arith.constant 0 : index
    %8 = vector.load %arg4[%c0_6, %c0_7] : memref<64x32xf32, #tpu.memory_space<vmem>>, vector<64x32xf32>
    %cst_8 = arith.constant dense<0.000000e+00> : vector<256x32xf32>
    %9 = tpu.matmul %7, %8, %cst_8 {dimension_numbers = #tpu.dot_dimension_numbers<[1], [0], [0], [1], [0, 0, 1, 1], [], []>} : vector<256x64xf32>, vector<64x32xf32>, vector<256x32xf32> -> vector<256x32xf32>
    %c0_9 = arith.constant 0 : index
    %c0_10 = arith.constant 0 : index
    %10 = vector.load %arg5[%c0_9, %c0_10] : memref<1x32xf32, #tpu.memory_space<vmem>>, vector<1x32xf32>
    %11 = vector.broadcast %10 : vector<1x32xf32> to vector<256x32xf32>
    %12 = arith.addf %9, %11 : vector<256x32xf32>
    %13 = math.tanh %12 : vector<256x32xf32>
    %c0_11 = arith.constant 0 : index
    %c0_12 = arith.constant 0 : index
    %14 = vector.load %arg6[%c0_11, %c0_12] : memref<32x16xf32, #tpu.memory_space<vmem>>, vector<32x16xf32>
    %cst_13 = arith.constant dense<0.000000e+00> : vector<256x16xf32>
    %15 = tpu.matmul %13, %14, %cst_13 {dimension_numbers = #tpu.dot_dimension_numbers<[1], [0], [0], [1], [0, 0, 1, 1], [], []>} : vector<256x32xf32>, vector<32x16xf32>, vector<256x16xf32> -> vector<256x16xf32>
    %c0_14 = arith.constant 0 : index
    %c0_15 = arith.constant 0 : index
    %16 = vector.load %arg7[%c0_14, %c0_15] : memref<1x16xf32, #tpu.memory_space<vmem>>, vector<1x16xf32>
    %17 = vector.broadcast %16 : vector<1x16xf32> to vector<256x16xf32>
    %18 = arith.addf %15, %17 : vector<256x16xf32>
    %19 = arith.negf %18 : vector<256x16xf32>
    %20 = math.exp %19 : vector<256x16xf32>
    %cst_16 = arith.constant 1.000000e+00 : f32
    %21 = vector.broadcast %cst_16 : f32 to vector<256x16xf32>
    %22 = arith.addf %21, %20 : vector<256x16xf32>
    %23 = arith.divf %21, %22 : vector<256x16xf32>
    %c0_17 = arith.constant 0 : index
    %c0_18 = arith.constant 0 : index
    %24 = vector.load %arg8[%c0_17, %c0_18] : memref<256x16xf32, #tpu.memory_space<vmem>>, vector<256x16xf32>
    tpu.vector_store %arg8[%c0_17, %c0_18], %23 {strides = array<i32>} : memref<256x16xf32, #tpu.memory_space<vmem>>, vector<256x16xf32>,
    return
  }
  func.func @transform_0(%arg0: i32) -> (i32, i32) {
    %c0_i32 = arith.constant 0 : i32
    %c0_i32_0 = arith.constant 0 : i32
    return %arg0, %c0_i32 : i32, i32
  }
  func.func @transform_1(%arg0: i32) -> (i32, i32) {
    %c0_i32 = arith.constant 0 : i32
    %c0_i32_0 = arith.constant 0 : i32
    %c0_i32_1 = arith.constant 0 : i32
    return %c0_i32, %c0_i32_0 : i32, i32
  }
  func.func @transform_2(%arg0: i32) -> (i32, i32) {
    %c0_i32 = arith.constant 0 : i32
    %c0_i32_0 = arith.constant 0 : i32
    %c0_i32_1 = arith.constant 0 : i32
    return %c0_i32, %c0_i32_0 : i32, i32
  }
  func.func @transform_3(%arg0: i32) -> (i32, i32) {
    %c0_i32 = arith.constant 0 : i32
    %c0_i32_0 = arith.constant 0 : i32
    %c0_i32_1 = arith.constant 0 : i32
    return %c0_i32, %c0_i32_0 : i32, i32
  }
  func.func @transform_4(%arg0: i32) -> (i32, i32) {
    %c0_i32 = arith.constant 0 : i32
    %c0_i32_0 = arith.constant 0 : i32
    %c0_i32_1 = arith.constant 0 : i32
    return %c0_i32, %c0_i32_0 : i32, i32
  }
  func.func @transform_5(%arg0: i32) -> (i32, i32) {
    %c0_i32 = arith.constant 0 : i32
    %c0_i32_0 = arith.constant 0 : i32
    %c0_i32_1 = arith.constant 0 : i32
    return %c0_i32, %c0_i32_0 : i32, i32
  }
  func.func @transform_6(%arg0: i32) -> (i32, i32) {
    %c0_i32 = arith.constant 0 : i32
    %c0_i32_0 = arith.constant 0 : i32
    %c0_i32_1 = arith.constant 0 : i32
    return %c0_i32, %c0_i32_0 : i32, i32
  }
  func.func @transform_7(%arg0: i32) -> (i32, i32) {
    %c0_i32 = arith.constant 0 : i32
    %c0_i32_0 = arith.constant 0 : i32
    return %arg0, %c0_i32 : i32, i32
  }
}

</mosaic_0001>

<llo_original>
// kernel: tpu_custom_call.1
$region0: #{tpu_custom_call.1}
  #allocation0 [shape = 'u32[]', space=smem, size = 0x4, offset = 0x4, fixed_abs, tag = 'smem constant byte address 0x4 - core index']
  #allocation1 [shape = 'u32[144,128]{1,0:T(1,128)}', space=vmem, size = 0x12000, scoped, tag = 'internal scratch']
  %s0 = inlined_call_operand.vmem [shape: f32[256,32], index: 0, kind: input, shape index: {}]
  %s1 = inlined_call_operand.vmem [shape: f32[32,64], index: 1, kind: input, shape index: {}]
  %s2 = inlined_call_operand.vmem [shape: f32[1,64], index: 2, kind: input, shape index: {}]
  %s3 = inlined_call_operand.vmem [shape: f32[64,32], index: 3, kind: input, shape index: {}]
  %s4 = inlined_call_operand.vmem [shape: f32[1,32], index: 4, kind: input, shape index: {}]
  %s5 = inlined_call_operand.vmem [shape: f32[32,16], index: 5, kind: input, shape index: {}]
  %s6 = inlined_call_operand.vmem [shape: f32[1,16], index: 6, kind: input, shape index: {}]
  %s7 = inlined_call_operand.vmem [shape: f32[256,16], index: 7, kind: output, shape index: {}]
  %s8 = sld [smem:[#allocation0]]
  $region38: #{tpu_custom_call.1} parent=0
    _
  %s10 = ssub.s32 1, %s8
  %s11 = scalar_select 0, %s10, %s8
  // Predicated region
  $region2: #{tpu_custom_call.1} parent=0 // pred_check
    _
  $region3: #{tpu_custom_call.1} parent=0 // pred_check_branch
    %13 = sbr.rel (0) target = $region5
  $region4: #{tpu_custom_call.1} parent=0 // pred_region
    _
  $region5: #{tpu_custom_call.1} parent=0 // pred_fallthru
    _
  // Predicated region
  $region6: #{tpu_custom_call.1} parent=0 // pred_check
    _
  $region7: #{tpu_custom_call.1} parent=0 // pred_check_branch
    %15 = sbr.rel (0) target = $region9
  $region8: #{tpu_custom_call.1} parent=0 // pred_region
    _
  $region9: #{tpu_custom_call.1} parent=0 // pred_fallthru
    _
  // Predicated region
  $region10: #{tpu_custom_call.1} parent=0 // pred_check
    _
  $region11: #{tpu_custom_call.1} parent=0 // pred_check_branch
    %17 = sbr.rel (0) target = $region13
  $region12: #{tpu_custom_call.1} parent=0 // pred_region
    _
  $region13: #{tpu_custom_call.1} parent=0 // pred_fallthru
    _
  // Predicated region
  $region14: #{tpu_custom_call.1} parent=0 // pred_check
    _
  $region15: #{tpu_custom_call.1} parent=0 // pred_check_branch
    %19 = sbr.rel (0) target = $region17
  $region16: #{tpu_custom_call.1} parent=0 // pred_region
    _
  $region17: #{tpu_custom_call.1} parent=0 // pred_fallthru
    _
  // Predicated region
  $region18: #{tpu_custom_call.1} parent=0 // pred_check
    _
  $region19: #{tpu_custom_call.1} parent=0 // pred_check_branch
    %21 = sbr.rel (0) target = $region21
  $region20: #{tpu_custom_call.1} parent=0 // pred_region
    _
  $region21: #{tpu_custom_call.1} parent=0 // pred_fallthru
    _
  // Predicated region
  $region22: #{tpu_custom_call.1} parent=0 // pred_check
    _
  $region23: #{tpu_custom_call.1} parent=0 // pred_check_branch
    %23 = sbr.rel (0) target = $region25
  $region24: #{tpu_custom_call.1} parent=0 // pred_region
    _
  $region25: #{tpu_custom_call.1} parent=0 // pred_fallthru
    _
  // Predicated region
  $region26: #{tpu_custom_call.1} parent=0 // pred_check
    _
  $region27: #{tpu_custom_call.1} parent=0 // pred_check_branch
    %25 = sbr.rel (0) target = $region29
  $region28: #{tpu_custom_call.1} parent=0 // pred_region
    _
  $region29: #{tpu_custom_call.1} parent=0 // pred_fallthru
    _
  %v26 = vld [vmem:[%s0] sm:$0xff]
  %v27 = vld [vmem:[%s0 + $0x8] sm:$0xff]
  %v28 = vld [vmem:[%s0 + $0x10] sm:$0xff]
  %v29 = vld [vmem:[%s0 + $0x18] sm:$0xff]
  %v30 = vld [vmem:[%s0 + $0x20] sm:$0xff]
  %v31 = vld [vmem:[%s0 + $0x28] sm:$0xff]
  %v32 = vld [vmem:[%s0 + $0x30] sm:$0xff]
  %v33 = vld [vmem:[%s0 + $0x38] sm:$0xff]
  %v34 = vld [vmem:[%s0 + $0x40] sm:$0xff]
  %v35 = vld [vmem:[%s0 + $0x48] sm:$0xff]
  %v36 = vld [vmem:[%s0 + $0x50] sm:$0xff]
  %v37 = vld [vmem:[%s0 + $0x58] sm:$0xff]
  %v38 = vld [vmem:[%s0 + $0x60] sm:$0xff]
  %v39 = vld [vmem:[%s0 + $0x68] sm:$0xff]
  %v40 = vld [vmem:[%s0 + $0x70] sm:$0xff]
  %v41 = vld [vmem:[%s0 + $0x78] sm:$0xff]
  %v42 = vld [vmem:[%s0 + $0x80] sm:$0xff]
  %v43 = vld [vmem:[%s0 + $0x88] sm:$0xff]
  %v44 = vld [vmem:[%s0 + $0x90] sm:$0xff]
  %v45 = vld [vmem:[%s0 + $0x98] sm:$0xff]
  %v46 = vld [vmem:[%s0 + $0xa0] sm:$0xff]
  %v47 = vld [vmem:[%s0 + $0xa8] sm:$0xff]
  %v48 = vld [vmem:[%s0 + $0xb0] sm:$0xff]
  %v49 = vld [vmem:[%s0 + $0xb8] sm:$0xff]
  %v50 = vld [vmem:[%s0 + $0xc0] sm:$0xff]
  %v51 = vld [vmem:[%s0 + $0xc8] sm:$0xff]
  %v52 = vld [vmem:[%s0 + $0xd0] sm:$0xff]
  %v53 = vld [vmem:[%s0 + $0xd8] sm:$0xff]
  %v54 = vld [vmem:[%s0 + $0xe0] sm:$0xff]
  %v55 = vld [vmem:[%s0 + $0xe8] sm:$0xff]
  %v56 = vld [vmem:[%s0 + $0xf0] sm:$0xff]
  %v57 = vld [vmem:[%s0 + $0xf8] sm:$0xff]
  %v58 = vld [vmem:[%s1] sm:$0xff]
  %v59 = vld [vmem:[%s1 + $0x8] sm:$0xff]
  %v60 = vld [vmem:[%s1 + $0x10] sm:$0xff]
  %v61 = vld [vmem:[%s1 + $0x18] sm:$0xff]
  %v62 = vld [vmem:[%s2] sm:$0x1]
  %v64 = vlaneseq
  %v65 = vshrl.u32 %v64, 7
  %v66 = vsub.s32 0, %v65
  %v67 = vrot.slane %v62, %v66
  %vm69 = vcmask 261120
  %v71 = vsel %vm69, %v26, 0
  %v74 = vsel %vm69, %v27, 0
  %v77 = vsel %vm69, %v28, 0
  %v80 = vsel %vm69, %v29, 0
  %v83 = vsel %vm69, %v30, 0
  %v86 = vsel %vm69, %v31, 0
  %v89 = vsel %vm69, %v32, 0
  %v92 = vsel %vm69, %v33, 0
  %v95 = vsel %vm69, %v34, 0
  %v98 = vsel %vm69, %v35, 0
  %v101 = vsel %vm69, %v36, 0
  %v104 = vsel %vm69, %v37, 0
  %v107 = vsel %vm69, %v38, 0
  %v110 = vsel %vm69, %v39, 0
  %v113 = vsel %vm69, %v40, 0
  %v116 = vsel %vm69, %v41, 0
  %v119 = vsel %vm69, %v42, 0
  %v122 = vsel %vm69, %v43, 0
  %v125 = vsel %vm69, %v44, 0
  %v128 = vsel %vm69, %v45, 0
  %v131 = vsel %vm69, %v46, 0
  %v134 = vsel %vm69, %v47, 0
  %v137 = vsel %vm69, %v48, 0
  %v140 = vsel %vm69, %v49, 0
  %v143 = vsel %vm69, %v50, 0
  %v146 = vsel %vm69, %v51, 0
  %v149 = vsel %vm69, %v52, 0
  %v152 = vsel %vm69, %v53, 0
  %v155 = vsel %vm69, %v54, 0
  %v158 = vsel %vm69, %v55, 0
  %v161 = vsel %vm69, %v56, 0
  %v164 = vsel %vm69, %v57, 0
  %166 = vmatprep.subr.mxu0 0.0
  %167 = vmatpush1.msra.mxu0 %v58
  %168 = vmatprep.subr.mxu0 0.0
  %169 = vmatpush1.msra.mxu0 %v59
  %170 = vmatprep.subr.mxu0 0.0
  %171 = vmatpush1.msra.mxu0 %v60
  %172 = vmatprep.subr.mxu0 0.0
  %173 = vmatpush1.msra.mxu0 %v61
  %174 = vmatprep.subr.mxu0 0.0
  %175 = vmatpush1.msra.mxu0 0.0
  %176 = vmatprep.subr.mxu0 0.0
  %177 = vmatpush1.msra.mxu0 0.0
  %178 = vmatprep.subr.mxu0 0.0
  %179 = vmatpush1.msra.mxu0 0.0
  %180 = vmatprep.subr.mxu0 0.0
  %181 = vmatpush1.msra.mxu0 0.0
  %182 = vmatprep.subr.mxu0 0.0
  %183 = vmatpush1.msra.mxu0 0.0
  %184 = vmatprep.subr.mxu0 0.0
  %185 = vmatpush1.msra.mxu0 0.0
  %186 = vmatprep.subr.mxu0 0.0
  %187 = vmatpush1.msra.mxu0 0.0
  %188 = vmatprep.subr.mxu0 0.0
  %189 = vmatpush1.msra.mxu0 0.0
  %190 = vmatprep.subr.mxu0 0.0
  %191 = vmatpush1.msra.mxu0 0.0
  %192 = vmatprep.subr.mxu0 0.0
  %193 = vmatpush1.msra.mxu0 0.0
  %194 = vmatprep.subr.mxu0 0.0
  %195 = vmatpush1.msra.mxu0 0.0
  %196 = vmatprep.subr.mxu0 0.0
  %197 = vmatpush1.msra.mxu0 0.0
  %198 = vmatprep.subr.mxu0 0.0
  %199 = vmatpush1.msra.mxu0 0.0
  %200 = vmatprep.subr.mxu0 0.0
  %201 = vmatpush1.msra.mxu0 0.0
  %202 = vmatprep.subr.mxu0 0.0
  %203 = vmatpush1.msra.mxu0 0.0
  %204 = vmatprep.subr.mxu0 0.0
  %205 = vmatpush1.msra.mxu0 0.0
  %206 = vmatprep.subr.mxu0 0.0
  %207 = vmatpush1.msra.mxu0 0.0
  %208 = vmatprep.subr.mxu0 0.0
  %209 = vmatpush1.msra.mxu0 0.0
  %210 = vmatprep.subr.mxu0 0.0
  %211 = vmatpush1.msra.mxu0 0.0
  %212 = vmatprep.subr.mxu0 0.0
  %213 = vmatpush1.msra.mxu0 0.0
  %214 = vmatprep.subr.mxu0 0.0
  %215 = vmatpush1.msra.mxu0 0.0
  %216 = vmatprep.subr.mxu0 0.0
  %217 = vmatpush1.msra.mxu0 0.0
  %218 = vmatprep.subr.mxu0 0.0
  %219 = vmatpush1.msra.mxu0 0.0
  %220 = vmatprep.subr.mxu0 0.0
  %221 = vmatpush1.msra.mxu0 0.0
  %222 = vmatprep.subr.mxu0 0.0
  %223 = vmatpush1.msra.mxu0 0.0
  %224 = vmatprep.subr.mxu0 0.0
  %225 = vmatpush1.msra.mxu0 0.0
  %226 = vmatprep.subr.mxu0 0.0
  %227 = vmatpush1.msra.mxu0 0.0
  %228 = vmatprep.subr.mxu0 0.0
  %229 = vmatpush1.msra.mxu0 0.0
  %230 = vmatprep.mubr.f32.mxu0 0.0
  %231 = vmatmul.mubr.f32.gmra.mrb[0].mxu0 %v71
  %v232 = vpop.f32.mrb[0].mxu0
  %v233 = vadd.f32 %v67, %v232
  %v234 = vpop.f32.mrb[0].mxu0
  %235 = vmatprep.mubr.f32.mxu0 0.0
  %236 = vmatmul.mubr.f32.gmra.mrb[0].mxu0 %v74
  %v237 = vpop.f32.mrb[0].mxu0
  %v238 = vadd.f32 %v67, %v237
  %v239 = vpop.f32.mrb[0].mxu0
  %240 = vmatprep.mubr.f32.mxu0 0.0
  %241 = vmatmul.mubr.f32.gmra.mrb[0].mxu0 %v77
  %v242 = vpop.f32.mrb[0].mxu0
  %v243 = vadd.f32 %v67, %v242
  %v244 = vpop.f32.mrb[0].mxu0
  %245 = vmatprep.mubr.f32.mxu0 0.0
  %246 = vmatmul.mubr.f32.gmra.mrb[0].mxu0 %v80
  %v247 = vpop.f32.mrb[0].mxu0
  %v248 = vadd.f32 %v67, %v247
  %v249 = vpop.f32.mrb[0].mxu0
  %250 = vmatprep.mubr.f32.mxu0 0.0
  %251 = vmatmul.mubr.f32.gmra.mrb[0].mxu0 %v83
  %v252 = vpop.f32.mrb[0].mxu0
  %v253 = vadd.f32 %v67, %v252
  %v254 = vpop.f32.mrb[0].mxu0
  %255 = vmatprep.mubr.f32.mxu0 0.0
  %256 = vmatmul.mubr.f32.gmra.mrb[0].mxu0 %v86
  %v257 = vpop.f32.mrb[0].mxu0
  %v258 = vadd.f32 %v67, %v257
  %v259 = vpop.f32.mrb[0].mxu0
  %260 = vmatprep.mubr.f32.mxu0 0.0
  %261 = vmatmul.mubr.f32.gmra.mrb[0].mxu0 %v89
  %v262 = vpop.f32.mrb[0].mxu0
  %v263 = vadd.f32 %v67, %v262
  %v264 = vpop.f32.mrb[0].mxu0
  %265 = vmatprep.mubr.f32.mxu0 0.0
  %266 = vmatmul.mubr.f32.gmra.mrb[0].mxu0 %v92
  %v267 = vpop.f32.mrb[0].mxu0
  %v268 = vadd.f32 %v67, %v267
  %v269 = vpop.f32.mrb[0].mxu0
  %270 = vmatprep.mubr.f32.mxu0 0.0
  %271 = vmatmul.mubr.f32.gmra.mrb[0].mxu0 %v95
  %v272 = vpop.f32.mrb[0].mxu0
  %v273 = vadd.f32 %v67, %v272
  %v274 = vpop.f32.mrb[0].mxu0
  %275 = vmatprep.mubr.f32.mxu0 0.0
  %276 = vmatmul.mubr.f32.gmra.mrb[0].mxu0 %v98
  %v277 = vpop.f32.mrb[0].mxu0
  %v278 = vadd.f32 %v67, %v277
  %v279 = vpop.f32.mrb[0].mxu0
  %280 = vmatprep.mubr.f32.mxu0 0.0
  %281 = vmatmul.mubr.f32.gmra.mrb[0].mxu0 %v101
  %v282 = vpop.f32.mrb[0].mxu0
  %v283 = vadd.f32 %v67, %v282
  %v284 = vpop.f32.mrb[0].mxu0
  %285 = vmatprep.mubr.f32.mxu0 0.0
  %286 = vmatmul.mubr.f32.gmra.mrb[0].mxu0 %v104
  %v287 = vpop.f32.mrb[0].mxu0
  %v288 = vadd.f32 %v67, %v287
  %v289 = vpop.f32.mrb[0].mxu0
  %290 = vmatprep.mubr.f32.mxu0 0.0
  %291 = vmatmul.mubr.f32.gmra.mrb[0].mxu0 %v107
  %v292 = vpop.f32.mrb[0].mxu0
  %v293 = vadd.f32 %v67, %v292
  %v294 = vpop.f32.mrb[0].mxu0
  %295 = vmatprep.mubr.f32.mxu0 0.0
  %296 = vmatmul.mubr.f32.gmra.mrb[0].mxu0 %v110
  %v297 = vpop.f32.mrb[0].mxu0
  %v298 = vadd.f32 %v67, %v297
  %v299 = vpop.f32.mrb[0].mxu0
  %300 = vmatprep.mubr.f32.mxu0 0.0
  %301 = vmatmul.mubr.f32.gmra.mrb[0].mxu0 %v113
  %v302 = vpop.f32.mrb[0].mxu0
  %v303 = vadd.f32 %v67, %v302
  %v304 = vpop.f32.mrb[0].mxu0
  %305 = vmatprep.mubr.f32.mxu0 0.0
  %306 = vmatmul.mubr.f32.gmra.mrb[0].mxu0 %v116
  %v307 = vpop.f32.mrb[0].mxu0
  %v308 = vadd.f32 %v67, %v307
  %v309 = vpop.f32.mrb[0].mxu0
  %310 = vmatprep.mubr.f32.mxu0 0.0
  %311 = vmatmul.mubr.f32.gmra.mrb[0].mxu0 %v119
  %v312 = vpop.f32.mrb[0].mxu0
  %v313 = vadd.f32 %v67, %v312
  %v314 = vpop.f32.mrb[0].mxu0
  %315 = vmatprep.mubr.f32.mxu0 0.0
  %316 = vmatmul.mubr.f32.gmra.mrb[0].mxu0 %v122
  %v317 = vpop.f32.mrb[0].mxu0
  %v318 = vadd.f32 %v67, %v317
  %v319 = vpop.f32.mrb[0].mxu0
  %320 = vmatprep.mubr.f32.mxu0 0.0
  %321 = vmatmul.mubr.f32.gmra.mrb[0].mxu0 %v125
  %v322 = vpop.f32.mrb[0].mxu0
  %v323 = vadd.f32 %v67, %v322
  %v324 = vpop.f32.mrb[0].mxu0
  %325 = vmatprep.mubr.f32.mxu0 0.0
  %326 = vmatmul.mubr.f32.gmra.mrb[0].mxu0 %v128
  %v327 = vpop.f32.mrb[0].mxu0
  %v328 = vadd.f32 %v67, %v327
  %v329 = vpop.f32.mrb[0].mxu0
  %330 = vmatprep.mubr.f32.mxu0 0.0
  %331 = vmatmul.mubr.f32.gmra.mrb[0].mxu0 %v131
  %v332 = vpop.f32.mrb[0].mxu0
  %v333 = vadd.f32 %v67, %v332
  %v334 = vpop.f32.mrb[0].mxu0
  %335 = vmatprep.mubr.f32.mxu0 0.0
  %336 = vmatmul.mubr.f32.gmra.mrb[0].mxu0 %v134
  %v337 = vpop.f32.mrb[0].mxu0
  %v338 = vadd.f32 %v67, %v337
  %v339 = vpop.f32.mrb[0].mxu0
  %340 = vmatprep.mubr.f32.mxu0 0.0
  %341 = vmatmul.mubr.f32.gmra.mrb[0].mxu0 %v137
  %v342 = vpop.f32.mrb[0].mxu0
  %v343 = vadd.f32 %v67, %v342
  %v344 = vpop.f32.mrb[0].mxu0
  %345 = vmatprep.mubr.f32.mxu0 0.0
  %346 = vmatmul.mubr.f32.gmra.mrb[0].mxu0 %v140
  %v347 = vpop.f32.mrb[0].mxu0
  %v348 = vadd.f32 %v67, %v347
  %v349 = vpop.f32.mrb[0].mxu0
  %350 = vmatprep.mubr.f32.mxu0 0.0
  %351 = vmatmul.mubr.f32.gmra.mrb[0].mxu0 %v143
  %v352 = vpop.f32.mrb[0].mxu0
  %v353 = vadd.f32 %v67, %v352
  %v354 = vpop.f32.mrb[0].mxu0
  %355 = vmatprep.mubr.f32.mxu0 0.0
  %356 = vmatmul.mubr.f32.gmra.mrb[0].mxu0 %v146
  %v357 = vpop.f32.mrb[0].mxu0
  %v358 = vadd.f32 %v67, %v357
  %v359 = vpop.f32.mrb[0].mxu0
  %360 = vmatprep.mubr.f32.mxu0 0.0
  %361 = vmatmul.mubr.f32.gmra.mrb[0].mxu0 %v149
  %v362 = vpop.f32.mrb[0].mxu0
  %v363 = vadd.f32 %v67, %v362
  %v364 = vpop.f32.mrb[0].mxu0
  %365 = vmatprep.mubr.f32.mxu0 0.0
  %366 = vmatmul.mubr.f32.gmra.mrb[0].mxu0 %v152
  %v367 = vpop.f32.mrb[0].mxu0
  %v368 = vadd.f32 %v67, %v367
  %v369 = vpop.f32.mrb[0].mxu0
  %370 = vmatprep.mubr.f32.mxu0 0.0
  %371 = vmatmul.mubr.f32.gmra.mrb[0].mxu0 %v155
  %v372 = vpop.f32.mrb[0].mxu0
  %v373 = vadd.f32 %v67, %v372
  %v374 = vpop.f32.mrb[0].mxu0
  %375 = vmatprep.mubr.f32.mxu0 0.0
  %376 = vmatmul.mubr.f32.gmra.mrb[0].mxu0 %v158
  %v377 = vpop.f32.mrb[0].mxu0
  %v378 = vadd.f32 %v67, %v377
  %v379 = vpop.f32.mrb[0].mxu0
  %380 = vmatprep.mubr.f32.mxu0 0.0
  %381 = vmatmul.mubr.f32.gmra.mrb[0].mxu0 %v161
  %v382 = vpop.f32.mrb[0].mxu0
  %v383 = vadd.f32 %v67, %v382
  %v384 = vpop.f32.mrb[0].mxu0
  %385 = vmatprep.mubr.f32.mxu0 0.0
  %386 = vmatmul.mubr.f32.gmra.mrb[0].mxu0 %v164
  %v387 = vpop.f32.mrb[0].mxu0
  %v388 = vadd.f32 %v67, %v387
  %v389 = vpop.f32.mrb[0].mxu0
  %390 = vdwg.mxu0
  %v391 = vmax.f32 %v233, 0.0
  %v392 = vmax.f32 %v238, 0.0
  %v393 = vmax.f32 %v243, 0.0
  %v394 = vmax.f32 %v248, 0.0
  %v395 = vmax.f32 %v253, 0.0
  %v396 = vmax.f32 %v258, 0.0
  %v397 = vmax.f32 %v263, 0.0
  %v398 = vmax.f32 %v268, 0.0
  %v399 = vmax.f32 %v273, 0.0
  %v400 = vmax.f32 %v278, 0.0
  %v401 = vmax.f32 %v283, 0.0
  %v402 = vmax.f32 %v288, 0.0
  %v403 = vmax.f32 %v293, 0.0
  %v404 = vmax.f32 %v298, 0.0
  %v405 = vmax.f32 %v303, 0.0
  %v406 = vmax.f32 %v308, 0.0
  %v407 = vmax.f32 %v313, 0.0
  %v408 = vmax.f32 %v318, 0.0
  %v409 = vmax.f32 %v323, 0.0
  %v410 = vmax.f32 %v328, 0.0
  %v411 = vmax.f32 %v333, 0.0
  %v412 = vmax.f32 %v338, 0.0
  %v413 = vmax.f32 %v343, 0.0
  %v414 = vmax.f32 %v348, 0.0
  %v415 = vmax.f32 %v353, 0.0
  %v416 = vmax.f32 %v358, 0.0
  %v417 = vmax.f32 %v363, 0.0
  %v418 = vmax.f32 %v368, 0.0
  %v419 = vmax.f32 %v373, 0.0
  %v420 = vmax.f32 %v378, 0.0
  %v421 = vmax.f32 %v383, 0.0
  %v422 = vmax.f32 %v388, 0.0
  %v423 = vld [vmem:[%s3] sm:$0xff]
  %v424 = vld [vmem:[%s3 + $0x8] sm:$0xff]
  %v425 = vld [vmem:[%s3 + $0x10] sm:$0xff]
  %v426 = vld [vmem:[%s3 + $0x18] sm:$0xff]
  %v427 = vld [vmem:[%s3 + $0x20] sm:$0xff]
  %v428 = vld [vmem:[%s3 + $0x28] sm:$0xff]
  %v429 = vld [vmem:[%s3 + $0x30] sm:$0xff]
  %v430 = vld [vmem:[%s3 + $0x38] sm:$0xff]
  %v431 = vld [vmem:[%s4] sm:$0x1]
  %v433 = vlaneseq
  %v434 = vshrl.u32 %v433, 7
  %v435 = vsub.s32 0, %v434
  %v436 = vrot.slane %v431, %v435
  %vm438 = vcmask 523264
  %v440 = vsel %vm438, %v391, 0
  %v443 = vsel %vm438, %v392, 0
  %v446 = vsel %vm438, %v393, 0
  %v449 = vsel %vm438, %v394, 0
  %v452 = vsel %vm438, %v395, 0
  %v455 = vsel %vm438, %v396, 0
  %v458 = vsel %vm438, %v397, 0
  %v461 = vsel %vm438, %v398, 0
  %v464 = vsel %vm438, %v399, 0
  %v467 = vsel %vm438, %v400, 0
  %v470 = vsel %vm438, %v401, 0
  %v473 = vsel %vm438, %v402, 0
  %v476 = vsel %vm438, %v403, 0
  %v479 = vsel %vm438, %v404, 0
  %v482 = vsel %vm438, %v405, 0
  %v485 = vsel %vm438, %v406, 0
  %v488 = vsel %vm438, %v407, 0
  %v491 = vsel %vm438, %v408, 0
  %v494 = vsel %vm438, %v409, 0
  %v497 = vsel %vm438, %v410, 0
  %v500 = vsel %vm438, %v411, 0
  %v503 = vsel %vm438, %v412, 0
  %v506 = vsel %vm438, %v413, 0
  %v509 = vsel %vm438, %v414, 0
  %v512 = vsel %vm438, %v415, 0
  %v515 = vsel %vm438, %v416, 0
  %v518 = vsel %vm438, %v417, 0
  %v521 = vsel %vm438, %v418, 0
  %v524 = vsel %vm438, %v419, 0
  %v527 = vsel %vm438, %v420, 0
  %v530 = vsel %vm438, %v421, 0
  %v533 = vsel %vm438, %v422, 0
  %535 = vmatprep.subr.mxu0 0.0
  %536 = vmatpush1.msra.mxu0 %v423
  %537 = vmatprep.subr.mxu0 0.0
  %538 = vmatpush1.msra.mxu0 %v424
  %539 = vmatprep.subr.mxu0 0.0
  %540 = vmatpush1.msra.mxu0 %v425
  %541 = vmatprep.subr.mxu0 0.0
  %542 = vmatpush1.msra.mxu0 %v426
  %543 = vmatprep.subr.mxu0 0.0
  %544 = vmatpush1.msra.mxu0 %v427
  %545 = vmatprep.subr.mxu0 0.0
  %546 = vmatpush1.msra.mxu0 %v428
  %547 = vmatprep.subr.mxu0 0.0
  %548 = vmatpush1.msra.mxu0 %v429
  %549 = vmatprep.subr.mxu0 0.0
  %550 = vmatpush1.msra.mxu0 %v430
  %551 = vmatprep.subr.mxu0 0.0
  %552 = vmatpush1.msra.mxu0 0.0
  %553 = vmatprep.subr.mxu0 0.0
  %554 = vmatpush1.msra.mxu0 0.0
  %555 = vmatprep.subr.mxu0 0.0
  %556 = vmatpush1.msra.mxu0 0.0
  %557 = vmatprep.subr.mxu0 0.0
  %558 = vmatpush1.msra.mxu0 0.0
  %559 = vmatprep.subr.mxu0 0.0
  %560 = vmatpush1.msra.mxu0 0.0
  %561 = vmatprep.subr.mxu0 0.0
  %562 = vmatpush1.msra.mxu0 0.0
  %563 = vmatprep.subr.mxu0 0.0
  %564 = vmatpush1.msra.mxu0 0.0
  %565 = vmatprep.subr.mxu0 0.0
  %566 = vmatpush1.msra.mxu0 0.0
  %567 = vmatprep.subr.mxu0 0.0
  %568 = vmatpush1.msra.mxu0 0.0
  %569 = vmatprep.subr.mxu0 0.0
  %570 = vmatpush1.msra.mxu0 0.0
  %571 = vmatprep.subr.mxu0 0.0
  %572 = vmatpush1.msra.mxu0 0.0
  %573 = vmatprep.subr.mxu0 0.0
  %574 = vmatpush1.msra.mxu0 0.0
  %575 = vmatprep.subr.mxu0 0.0
  %576 = vmatpush1.msra.mxu0 0.0
  %577 = vmatprep.subr.mxu0 0.0
  %578 = vmatpush1.msra.mxu0 0.0
  %579 = vmatprep.subr.mxu0 0.0
  %580 = vmatpush1.msra.mxu0 0.0
  %581 = vmatprep.subr.mxu0 0.0
  %582 = vmatpush1.msra.mxu0 0.0
  %583 = vmatprep.subr.mxu0 0.0
  %584 = vmatpush1.msra.mxu0 0.0
  %585 = vmatprep.subr.mxu0 0.0
  %586 = vmatpush1.msra.mxu0 0.0
  %587 = vmatprep.subr.mxu0 0.0
  %588 = vmatpush1.msra.mxu0 0.0
  %589 = vmatprep.subr.mxu0 0.0
  %590 = vmatpush1.msra.mxu0 0.0
  %591 = vmatprep.subr.mxu0 0.0
  %592 = vmatpush1.msra.mxu0 0.0
  %593 = vmatprep.subr.mxu0 0.0
  %594 = vmatpush1.msra.mxu0 0.0
  %595 = vmatprep.subr.mxu0 0.0
  %596 = vmatpush1.msra.mxu0 0.0
  %597 = vmatprep.subr.mxu0 0.0
  %598 = vmatpush1.msra.mxu0 0.0
  %599 = vmatprep.mubr.f32.mxu0 0.0
  %600 = vmatmul.mubr.f32.gmra.mrb[0].mxu0 %v440
  %v601 = vpop.f32.mrb[0].mxu0
  %v602 = vadd.f32 %v436, %v601
  %v603 = vpop.f32.mrb[0].mxu0
  %604 = vmatprep.mubr.f32.mxu0 0.0
  %605 = vmatmul.mubr.f32.gmra.mrb[0].mxu0 %v443
  %v606 = vpop.f32.mrb[0].mxu0
  %v607 = vadd.f32 %v436, %v606
  %v608 = vpop.f32.mrb[0].mxu0
  %609 = vmatprep.mubr.f32.mxu0 0.0
  %610 = vmatmul.mubr.f32.gmra.mrb[0].mxu0 %v446
  %v611 = vpop.f32.mrb[0].mxu0
  %v612 = vadd.f32 %v436, %v611
  %v613 = vpop.f32.mrb[0].mxu0
  %614 = vmatprep.mubr.f32.mxu0 0.0
  %615 = vmatmul.mubr.f32.gmra.mrb[0].mxu0 %v449
  %v616 = vpop.f32.mrb[0].mxu0
  %v617 = vadd.f32 %v436, %v616
  %v618 = vpop.f32.mrb[0].mxu0
  %619 = vmatprep.mubr.f32.mxu0 0.0
  %620 = vmatmul.mubr.f32.gmra.mrb[0].mxu0 %v452
  %v621 = vpop.f32.mrb[0].mxu0
  %v622 = vadd.f32 %v436, %v621
  %v623 = vpop.f32.mrb[0].mxu0
  %624 = vmatprep.mubr.f32.mxu0 0.0
  %625 = vmatmul.mubr.f32.gmra.mrb[0].mxu0 %v455
  %v626 = vpop.f32.mrb[0].mxu0
  %v627 = vadd.f32 %v436, %v626
  %v628 = vpop.f32.mrb[0].mxu0
  %629 = vmatprep.mubr.f32.mxu0 0.0
  %630 = vmatmul.mubr.f32.gmra.mrb[0].mxu0 %v458
  %v631 = vpop.f32.mrb[0].mxu0
  %v632 = vadd.f32 %v436, %v631
  %v633 = vpop.f32.mrb[0].mxu0
  %634 = vmatprep.mubr.f32.mxu0 0.0
  %635 = vmatmul.mubr.f32.gmra.mrb[0].mxu0 %v461
  %v636 = vpop.f32.mrb[0].mxu0
  %v637 = vadd.f32 %v436, %v636
  %v638 = vpop.f32.mrb[0].mxu0
  %639 = vmatprep.mubr.f32.mxu0 0.0
  %640 = vmatmul.mubr.f32.gmra.mrb[0].mxu0 %v464
  %v641 = vpop.f32.mrb[0].mxu0
  %v642 = vadd.f32 %v436, %v641
  %v643 = vpop.f32.mrb[0].mxu0
  %644 = vmatprep.mubr.f32.mxu0 0.0
  %645 = vmatmul.mubr.f32.gmra.mrb[0].mxu0 %v467
  %v646 = vpop.f32.mrb[0].mxu0
  %v647 = vadd.f32 %v436, %v646
  %v648 = vpop.f32.mrb[0].mxu0
  %649 = vmatprep.mubr.f32.mxu0 0.0
  %650 = vmatmul.mubr.f32.gmra.mrb[0].mxu0 %v470
  %v651 = vpop.f32.mrb[0].mxu0
  %v652 = vadd.f32 %v436, %v651
  %v653 = vpop.f32.mrb[0].mxu0
  %654 = vmatprep.mubr.f32.mxu0 0.0
  %655 = vmatmul.mubr.f32.gmra.mrb[0].mxu0 %v473
  %v656 = vpop.f32.mrb[0].mxu0
  %v657 = vadd.f32 %v436, %v656
  %v658 = vpop.f32.mrb[0].mxu0
  %659 = vmatprep.mubr.f32.mxu0 0.0
  %660 = vmatmul.mubr.f32.gmra.mrb[0].mxu0 %v476
  %v661 = vpop.f32.mrb[0].mxu0
  %v662 = vadd.f32 %v436, %v661
  %v663 = vpop.f32.mrb[0].mxu0
  %664 = vmatprep.mubr.f32.mxu0 0.0
  %665 = vmatmul.mubr.f32.gmra.mrb[0].mxu0 %v479
  %v666 = vpop.f32.mrb[0].mxu0
  %v667 = vadd.f32 %v436, %v666
  %v668 = vpop.f32.mrb[0].mxu0
  %669 = vmatprep.mubr.f32.mxu0 0.0
  %670 = vmatmul.mubr.f32.gmra.mrb[0].mxu0 %v482
  %v671 = vpop.f32.mrb[0].mxu0
  %v672 = vadd.f32 %v436, %v671
  %v673 = vpop.f32.mrb[0].mxu0
  %674 = vmatprep.mubr.f32.mxu0 0.0
  %675 = vmatmul.mubr.f32.gmra.mrb[0].mxu0 %v485
  %v676 = vpop.f32.mrb[0].mxu0
  %v677 = vadd.f32 %v436, %v676
  %v678 = vpop.f32.mrb[0].mxu0
  %679 = vmatprep.mubr.f32.mxu0 0.0
  %680 = vmatmul.mubr.f32.gmra.mrb[0].mxu0 %v488
  %v681 = vpop.f32.mrb[0].mxu0
  %v682 = vadd.f32 %v436, %v681
  %v683 = vpop.f32.mrb[0].mxu0
  %684 = vmatprep.mubr.f32.mxu0 0.0
  %685 = vmatmul.mubr.f32.gmra.mrb[0].mxu0 %v491
  %v686 = vpop.f32.mrb[0].mxu0
  %v687 = vadd.f32 %v436, %v686
  %v688 = vpop.f32.mrb[0].mxu0
  %689 = vmatprep.mubr.f32.mxu0 0.0
  %690 = vmatmul.mubr.f32.gmra.mrb[0].mxu0 %v494
  %v691 = vpop.f32.mrb[0].mxu0
  %v692 = vadd.f32 %v436, %v691
  %v693 = vpop.f32.mrb[0].mxu0
  %694 = vmatprep.mubr.f32.mxu0 0.0
  %695 = vmatmul.mubr.f32.gmra.mrb[0].mxu0 %v497
  %v696 = vpop.f32.mrb[0].mxu0
  %v697 = vadd.f32 %v436, %v696
  %v698 = vpop.f32.mrb[0].mxu0
  %699 = vmatprep.mubr.f32.mxu0 0.0
  %700 = vmatmul.mubr.f32.gmra.mrb[0].mxu0 %v500
  %v701 = vpop.f32.mrb[0].mxu0
  %v702 = vadd.f32 %v436, %v701
  %v703 = vpop.f32.mrb[0].mxu0
  %704 = vmatprep.mubr.f32.mxu0 0.0
  %705 = vmatmul.mubr.f32.gmra.mrb[0].mxu0 %v503
  %v706 = vpop.f32.mrb[0].mxu0
  %v707 = vadd.f32 %v436, %v706
  %v708 = vpop.f32.mrb[0].mxu0
  %709 = vmatprep.mubr.f32.mxu0 0.0
  %710 = vmatmul.mubr.f32.gmra.mrb[0].mxu0 %v506
  %v711 = vpop.f32.mrb[0].mxu0
  %v712 = vadd.f32 %v436, %v711
  %v713 = vpop.f32.mrb[0].mxu0
  %714 = vmatprep.mubr.f32.mxu0 0.0
  %715 = vmatmul.mubr.f32.gmra.mrb[0].mxu0 %v509
  %v716 = vpop.f32.mrb[0].mxu0
  %v717 = vadd.f32 %v436, %v716
  %v718 = vpop.f32.mrb[0].mxu0
  %719 = vmatprep.mubr.f32.mxu0 0.0
  %720 = vmatmul.mubr.f32.gmra.mrb[0].mxu0 %v512
  %v721 = vpop.f32.mrb[0].mxu0
  %v722 = vadd.f32 %v436, %v721
  %v723 = vpop.f32.mrb[0].mxu0
  %724 = vmatprep.mubr.f32.mxu0 0.0
  %725 = vmatmul.mubr.f32.gmra.mrb[0].mxu0 %v515
  %v726 = vpop.f32.mrb[0].mxu0
  %v727 = vadd.f32 %v436, %v726
  %v728 = vpop.f32.mrb[0].mxu0
  %729 = vmatprep.mubr.f32.mxu0 0.0
  %730 = vmatmul.mubr.f32.gmra.mrb[0].mxu0 %v518
  %v731 = vpop.f32.mrb[0].mxu0
  %v732 = vadd.f32 %v436, %v731
  %v733 = vpop.f32.mrb[0].mxu0
  %734 = vmatprep.mubr.f32.mxu0 0.0
  %735 = vmatmul.mubr.f32.gmra.mrb[0].mxu0 %v521
  %v736 = vpop.f32.mrb[0].mxu0
  %v737 = vadd.f32 %v436, %v736
  %v738 = vpop.f32.mrb[0].mxu0
  %739 = vmatprep.mubr.f32.mxu0 0.0
  %740 = vmatmul.mubr.f32.gmra.mrb[0].mxu0 %v524
  %v741 = vpop.f32.mrb[0].mxu0
  %v742 = vadd.f32 %v436, %v741
  %v743 = vpop.f32.mrb[0].mxu0
  %744 = vmatprep.mubr.f32.mxu0 0.0
  %745 = vmatmul.mubr.f32.gmra.mrb[0].mxu0 %v527
  %v746 = vpop.f32.mrb[0].mxu0
  %v747 = vadd.f32 %v436, %v746
  %v748 = vpop.f32.mrb[0].mxu0
  %749 = vmatprep.mubr.f32.mxu0 0.0
  %750 = vmatmul.mubr.f32.gmra.mrb[0].mxu0 %v530
  %v751 = vpop.f32.mrb[0].mxu0
  %v752 = vadd.f32 %v436, %v751
  %v753 = vpop.f32.mrb[0].mxu0
  %754 = vmatprep.mubr.f32.mxu0 0.0
  %755 = vmatmul.mubr.f32.gmra.mrb[0].mxu0 %v533
  %v756 = vpop.f32.mrb[0].mxu0
  %v757 = vadd.f32 %v436, %v756
  %v758 = vpop.f32.mrb[0].mxu0
  %759 = vdwg.mxu0
  %v760 = vtanh.pop %v602
  %v761 = vtanh.pop %v607
  %v762 = vtanh.pop %v612
  %v763 = vtanh.pop %v617
  %v764 = vtanh.pop %v622
  %v765 = vtanh.pop %v627
  %v766 = vtanh.pop %v632
  %v767 = vtanh.pop %v637
  %v768 = vtanh.pop %v642
  %v769 = vtanh.pop %v647
  %v770 = vtanh.pop %v652
  %v771 = vtanh.pop %v657
  %v772 = vtanh.pop %v662
  %v773 = vtanh.pop %v667
  %v774 = vtanh.pop %v672
  %v775 = vtanh.pop %v677
  %v776 = vtanh.pop %v682
  %v777 = vtanh.pop %v687
  %v778 = vtanh.pop %v692
  %v779 = vtanh.pop %v697
  %v780 = vtanh.pop %v702
  %v781 = vtanh.pop %v707
  %v782 = vtanh.pop %v712
  %v783 = vtanh.pop %v717
  %v784 = vtanh.pop %v722
  %v785 = vtanh.pop %v727
  %v786 = vtanh.pop %v732
  %v787 = vtanh.pop %v737
  %v788 = vtanh.pop %v742
  %v789 = vtanh.pop %v747
  %v790 = vtanh.pop %v752
  %v791 = vtanh.pop %v757
  %v792 = vld [vmem:[%s5] sm:$0xff]
  %v793 = vld [vmem:[%s5 + $0x8] sm:$0xff]
  %v794 = vld [vmem:[%s5 + $0x10] sm:$0xff]
  %v795 = vld [vmem:[%s5 + $0x18] sm:$0xff]
  %v796 = vld [vmem:[%s6] sm:$0x1]
  %v798 = vlaneseq
  %v799 = vshrl.u32 %v798, 7
  %v800 = vsub.s32 0, %v799
  %v801 = vrot.slane %v796, %v800
  %v804 = vsel %vm69, %v760, 0
  %v807 = vsel %vm69, %v761, 0
  %v810 = vsel %vm69, %v762, 0
  %v813 = vsel %vm69, %v763, 0
  %v816 = vsel %vm69, %v764, 0
  %v819 = vsel %vm69, %v765, 0
  %v822 = vsel %vm69, %v766, 0
  %v825 = vsel %vm69, %v767, 0
  %v828 = vsel %vm69, %v768, 0
  %v831 = vsel %vm69, %v769, 0
  %v834 = vsel %vm69, %v770, 0
  %v837 = vsel %vm69, %v771, 0
  %v840 = vsel %vm69, %v772, 0
  %v843 = vsel %vm69, %v773, 0
  %v846 = vsel %vm69, %v774, 0
  %v849 = vsel %vm69, %v775, 0
  %v852 = vsel %vm69, %v776, 0
  %v855 = vsel %vm69, %v777, 0
  %v858 = vsel %vm69, %v778, 0
  %v861 = vsel %vm69, %v779, 0
  %v864 = vsel %vm69, %v780, 0
  %v867 = vsel %vm69, %v781, 0
  %v870 = vsel %vm69, %v782, 0
  %v873 = vsel %vm69, %v783, 0
  %v876 = vsel %vm69, %v784, 0
  %v879 = vsel %vm69, %v785, 0
  %v882 = vsel %vm69, %v786, 0
  %v885 = vsel %vm69, %v787, 0
  %v888 = vsel %vm69, %v788, 0
  %v891 = vsel %vm69, %v789, 0
  %v894 = vsel %vm69, %v790, 0
  %v897 = vsel %vm69, %v791, 0
  %899 = vmatprep.subr.mxu0 0.0
  %900 = vmatpush1.msra.mxu0 %v792
  %901 = vmatprep.subr.mxu0 0.0
  %902 = vmatpush1.msra.mxu0 %v793
  %903 = vmatprep.subr.mxu0 0.0
  %904 = vmatpush1.msra.mxu0 %v794
  %905 = vmatprep.subr.mxu0 0.0
  %906 = vmatpush1.msra.mxu0 %v795
  %907 = vmatprep.subr.mxu0 0.0
  %908 = vmatpush1.msra.mxu0 0.0
  %909 = vmatprep.subr.mxu0 0.0
  %910 = vmatpush1.msra.mxu0 0.0
  %911 = vmatprep.subr.mxu0 0.0
  %912 = vmatpush1.msra.mxu0 0.0
  %913 = vmatprep.subr.mxu0 0.0
  %914 = vmatpush1.msra.mxu0 0.0
  %915 = vmatprep.subr.mxu0 0.0
  %916 = vmatpush1.msra.mxu0 0.0
  %917 = vmatprep.subr.mxu0 0.0
  %918 = vmatpush1.msra.mxu0 0.0
  %919 = vmatprep.subr.mxu0 0.0
  %920 = vmatpush1.msra.mxu0 0.0
  %921 = vmatprep.subr.mxu0 0.0
  %922 = vmatpush1.msra.mxu0 0.0
  %923 = vmatprep.subr.mxu0 0.0
  %924 = vmatpush1.msra.mxu0 0.0
  %925 = vmatprep.subr.mxu0 0.0
  %926 = vmatpush1.msra.mxu0 0.0
  %927 = vmatprep.subr.mxu0 0.0
  %928 = vmatpush1.msra.mxu0 0.0
  %929 = vmatprep.subr.mxu0 0.0
  %930 = vmatpush1.msra.mxu0 0.0
  %931 = vmatprep.subr.mxu0 0.0
  %932 = vmatpush1.msra.mxu0 0.0
  %933 = vmatprep.subr.mxu0 0.0
  %934 = vmatpush1.msra.mxu0 0.0
  %935 = vmatprep.subr.mxu0 0.0
  %936 = vmatpush1.msra.mxu0 0.0
  %937 = vmatprep.subr.mxu0 0.0
  %938 = vmatpush1.msra.mxu0 0.0
  %939 = vmatprep.subr.mxu0 0.0
  %940 = vmatpush1.msra.mxu0 0.0
  %941 = vmatprep.subr.mxu0 0.0
  %942 = vmatpush1.msra.mxu0 0.0
  %943 = vmatprep.subr.mxu0 0.0
  %944 = vmatpush1.msra.mxu0 0.0
  %945 = vmatprep.subr.mxu0 0.0
  %946 = vmatpush1.msra.mxu0 0.0
  %947 = vmatprep.subr.mxu0 0.0
  %948 = vmatpush1.msra.mxu0 0.0
  %949 = vmatprep.subr.mxu0 0.0
  %950 = vmatpush1.msra.mxu0 0.0
  %951 = vmatprep.subr.mxu0 0.0
  %952 = vmatpush1.msra.mxu0 0.0
  %953 = vmatprep.subr.mxu0 0.0
  %954 = vmatpush1.msra.mxu0 0.0
  %955 = vmatprep.subr.mxu0 0.0
  %956 = vmatpush1.msra.mxu0 0.0
  %957 = vmatprep.subr.mxu0 0.0
  %958 = vmatpush1.msra.mxu0 0.0
  %959 = vmatprep.subr.mxu0 0.0
  %960 = vmatpush1.msra.mxu0 0.0
  %961 = vmatprep.subr.mxu0 0.0
  %962 = vmatpush1.msra.mxu0 0.0
  %963 = vmatprep.mubr.f32.mxu0 0.0
  %964 = vmatmul.mubr.f32.gmra.mrb[0].mxu0 %v804
  %v965 = vpop.f32.mrb[0].mxu0
  %v966 = vadd.f32 %v801, %v965
  %v967 = vpop.f32.mrb[0].mxu0
  %968 = vmatprep.mubr.f32.mxu0 0.0
  %969 = vmatmul.mubr.f32.gmra.mrb[0].mxu0 %v807
  %v970 = vpop.f32.mrb[0].mxu0
  %v971 = vadd.f32 %v801, %v970
  %v972 = vpop.f32.mrb[0].mxu0
  %973 = vmatprep.mubr.f32.mxu0 0.0
  %974 = vmatmul.mubr.f32.gmra.mrb[0].mxu0 %v810
  %v975 = vpop.f32.mrb[0].mxu0
  %v976 = vadd.f32 %v801, %v975
  %v977 = vpop.f32.mrb[0].mxu0
  %978 = vmatprep.mubr.f32.mxu0 0.0
  %979 = vmatmul.mubr.f32.gmra.mrb[0].mxu0 %v813
  %v980 = vpop.f32.mrb[0].mxu0
  %v981 = vadd.f32 %v801, %v980
  %v982 = vpop.f32.mrb[0].mxu0
  %983 = vmatprep.mubr.f32.mxu0 0.0
  %984 = vmatmul.mubr.f32.gmra.mrb[0].mxu0 %v816
  %v985 = vpop.f32.mrb[0].mxu0
  %v986 = vadd.f32 %v801, %v985
  %v987 = vpop.f32.mrb[0].mxu0
  %988 = vmatprep.mubr.f32.mxu0 0.0
  %989 = vmatmul.mubr.f32.gmra.mrb[0].mxu0 %v819
  %v990 = vpop.f32.mrb[0].mxu0
  %v991 = vadd.f32 %v801, %v990
  %v992 = vpop.f32.mrb[0].mxu0
  %993 = vmatprep.mubr.f32.mxu0 0.0
  %994 = vmatmul.mubr.f32.gmra.mrb[0].mxu0 %v822
  %v995 = vpop.f32.mrb[0].mxu0
  %v996 = vadd.f32 %v801, %v995
  %v997 = vpop.f32.mrb[0].mxu0
  %998 = vmatprep.mubr.f32.mxu0 0.0
  %999 = vmatmul.mubr.f32.gmra.mrb[0].mxu0 %v825
  %v1000 = vpop.f32.mrb[0].mxu0
  %v1001 = vadd.f32 %v801, %v1000
  %v1002 = vpop.f32.mrb[0].mxu0
  %1003 = vmatprep.mubr.f32.mxu0 0.0
  %1004 = vmatmul.mubr.f32.gmra.mrb[0].mxu0 %v828
  %v1005 = vpop.f32.mrb[0].mxu0
  %v1006 = vadd.f32 %v801, %v1005
  %v1007 = vpop.f32.mrb[0].mxu0
  %1008 = vmatprep.mubr.f32.mxu0 0.0
  %1009 = vmatmul.mubr.f32.gmra.mrb[0].mxu0 %v831
  %v1010 = vpop.f32.mrb[0].mxu0
  %v1011 = vadd.f32 %v801, %v1010
  %v1012 = vpop.f32.mrb[0].mxu0
  %1013 = vmatprep.mubr.f32.mxu0 0.0
  %1014 = vmatmul.mubr.f32.gmra.mrb[0].mxu0 %v834
  %v1015 = vpop.f32.mrb[0].mxu0
  %v1016 = vadd.f32 %v801, %v1015
  %v1017 = vpop.f32.mrb[0].mxu0
  %1018 = vmatprep.mubr.f32.mxu0 0.0
  %1019 = vmatmul.mubr.f32.gmra.mrb[0].mxu0 %v837
  %v1020 = vpop.f32.mrb[0].mxu0
  %v1021 = vadd.f32 %v801, %v1020
  %v1022 = vpop.f32.mrb[0].mxu0
  %1023 = vmatprep.mubr.f32.mxu0 0.0
  %1024 = vmatmul.mubr.f32.gmra.mrb[0].mxu0 %v840
  %v1025 = vpop.f32.mrb[0].mxu0
  %v1026 = vadd.f32 %v801, %v1025
  %v1027 = vpop.f32.mrb[0].mxu0
  %1028 = vmatprep.mubr.f32.mxu0 0.0
  %1029 = vmatmul.mubr.f32.gmra.mrb[0].mxu0 %v843
  %v1030 = vpop.f32.mrb[0].mxu0
  %v1031 = vadd.f32 %v801, %v1030
  %v1032 = vpop.f32.mrb[0].mxu0
  %1033 = vmatprep.mubr.f32.mxu0 0.0
  %1034 = vmatmul.mubr.f32.gmra.mrb[0].mxu0 %v846
  %v1035 = vpop.f32.mrb[0].mxu0
  %v1036 = vadd.f32 %v801, %v1035
  %v1037 = vpop.f32.mrb[0].mxu0
  %1038 = vmatprep.mubr.f32.mxu0 0.0
  %1039 = vmatmul.mubr.f32.gmra.mrb[0].mxu0 %v849
  %v1040 = vpop.f32.mrb[0].mxu0
  %v1041 = vadd.f32 %v801, %v1040
  %v1042 = vpop.f32.mrb[0].mxu0
  %1043 = vmatprep.mubr.f32.mxu0 0.0
  %1044 = vmatmul.mubr.f32.gmra.mrb[0].mxu0 %v852
  %v1045 = vpop.f32.mrb[0].mxu0
  %v1046 = vadd.f32 %v801, %v1045
  %v1047 = vpop.f32.mrb[0].mxu0
  %1048 = vmatprep.mubr.f32.mxu0 0.0
  %1049 = vmatmul.mubr.f32.gmra.mrb[0].mxu0 %v855
  %v1050 = vpop.f32.mrb[0].mxu0
  %v1051 = vadd.f32 %v801, %v1050
  %v1052 = vpop.f32.mrb[0].mxu0
  %1053 = vmatprep.mubr.f32.mxu0 0.0
  %1054 = vmatmul.mubr.f32.gmra.mrb[0].mxu0 %v858
  %v1055 = vpop.f32.mrb[0].mxu0
  %v1056 = vadd.f32 %v801, %v1055
  %v1057 = vpop.f32.mrb[0].mxu0
  %1058 = vmatprep.mubr.f32.mxu0 0.0
  %1059 = vmatmul.mubr.f32.gmra.mrb[0].mxu0 %v861
  %v1060 = vpop.f32.mrb[0].mxu0
  %v1061 = vadd.f32 %v801, %v1060
  %v1062 = vpop.f32.mrb[0].mxu0
  %1063 = vmatprep.mubr.f32.mxu0 0.0
  %1064 = vmatmul.mubr.f32.gmra.mrb[0].mxu0 %v864
  %v1065 = vpop.f32.mrb[0].mxu0
  %v1066 = vadd.f32 %v801, %v1065
  %v1067 = vpop.f32.mrb[0].mxu0
  %1068 = vmatprep.mubr.f32.mxu0 0.0
  %1069 = vmatmul.mubr.f32.gmra.mrb[0].mxu0 %v867
  %v1070 = vpop.f32.mrb[0].mxu0
  %v1071 = vadd.f32 %v801, %v1070
  %v1072 = vpop.f32.mrb[0].mxu0
  %1073 = vmatprep.mubr.f32.mxu0 0.0
  %1074 = vmatmul.mubr.f32.gmra.mrb[0].mxu0 %v870
  %v1075 = vpop.f32.mrb[0].mxu0
  %v1076 = vadd.f32 %v801, %v1075
  %v1077 = vpop.f32.mrb[0].mxu0
  %1078 = vmatprep.mubr.f32.mxu0 0.0
  %1079 = vmatmul.mubr.f32.gmra.mrb[0].mxu0 %v873
  %v1080 = vpop.f32.mrb[0].mxu0
  %v1081 = vadd.f32 %v801, %v1080
  %v1082 = vpop.f32.mrb[0].mxu0
  %1083 = vmatprep.mubr.f32.mxu0 0.0
  %1084 = vmatmul.mubr.f32.gmra.mrb[0].mxu0 %v876
  %v1085 = vpop.f32.mrb[0].mxu0
  %v1086 = vadd.f32 %v801, %v1085
  %v1087 = vpop.f32.mrb[0].mxu0
  %1088 = vmatprep.mubr.f32.mxu0 0.0
  %1089 = vmatmul.mubr.f32.gmra.mrb[0].mxu0 %v879
  %v1090 = vpop.f32.mrb[0].mxu0
  %v1091 = vadd.f32 %v801, %v1090
  %v1092 = vpop.f32.mrb[0].mxu0
  %1093 = vmatprep.mubr.f32.mxu0 0.0
  %1094 = vmatmul.mubr.f32.gmra.mrb[0].mxu0 %v882
  %v1095 = vpop.f32.mrb[0].mxu0
  %v1096 = vadd.f32 %v801, %v1095
  %v1097 = vpop.f32.mrb[0].mxu0
  %1098 = vmatprep.mubr.f32.mxu0 0.0
  %1099 = vmatmul.mubr.f32.gmra.mrb[0].mxu0 %v885
  %v1100 = vpop.f32.mrb[0].mxu0
  %v1101 = vadd.f32 %v801, %v1100
  %v1102 = vpop.f32.mrb[0].mxu0
  %1103 = vmatprep.mubr.f32.mxu0 0.0
  %1104 = vmatmul.mubr.f32.gmra.mrb[0].mxu0 %v888
  %v1105 = vpop.f32.mrb[0].mxu0
  %v1106 = vadd.f32 %v801, %v1105
  %v1107 = vpop.f32.mrb[0].mxu0
  %1108 = vmatprep.mubr.f32.mxu0 0.0
  %1109 = vmatmul.mubr.f32.gmra.mrb[0].mxu0 %v891
  %v1110 = vpop.f32.mrb[0].mxu0
  %v1111 = vadd.f32 %v801, %v1110
  %v1112 = vpop.f32.mrb[0].mxu0
  %1113 = vmatprep.mubr.f32.mxu0 0.0
  %1114 = vmatmul.mubr.f32.gmra.mrb[0].mxu0 %v894
  %v1115 = vpop.f32.mrb[0].mxu0
  %v1116 = vadd.f32 %v801, %v1115
  %v1117 = vpop.f32.mrb[0].mxu0
  %1118 = vmatprep.mubr.f32.mxu0 0.0
  %1119 = vmatmul.mubr.f32.gmra.mrb[0].mxu0 %v897
  %v1120 = vpop.f32.mrb[0].mxu0
  %v1121 = vadd.f32 %v801, %v1120
  %v1122 = vpop.f32.mrb[0].mxu0
  %1123 = vdwg.mxu0
  %v1124 = vxor.u32 %v966, 2147483648
  %v1125 = vxor.u32 %v971, 2147483648
  %v1126 = vxor.u32 %v976, 2147483648
  %v1127 = vxor.u32 %v981, 2147483648
  %v1128 = vxor.u32 %v986, 2147483648
  %v1129 = vxor.u32 %v991, 2147483648
  %v1130 = vxor.u32 %v996, 2147483648
  %v1131 = vxor.u32 %v1001, 2147483648
  %v1132 = vxor.u32 %v1006, 2147483648
  %v1133 = vxor.u32 %v1011, 2147483648
  %v1134 = vxor.u32 %v1016, 2147483648
  %v1135 = vxor.u32 %v1021, 2147483648
  %v1136 = vxor.u32 %v1026, 2147483648
  %v1137 = vxor.u32 %v1031, 2147483648
  %v1138 = vxor.u32 %v1036, 2147483648
  %v1139 = vxor.u32 %v1041, 2147483648
  %v1140 = vxor.u32 %v1046, 2147483648
  %v1141 = vxor.u32 %v1051, 2147483648
  %v1142 = vxor.u32 %v1056, 2147483648
  %v1143 = vxor.u32 %v1061, 2147483648
  %v1144 = vxor.u32 %v1066, 2147483648
  %v1145 = vxor.u32 %v1071, 2147483648
  %v1146 = vxor.u32 %v1076, 2147483648
  %v1147 = vxor.u32 %v1081, 2147483648
  %v1148 = vxor.u32 %v1086, 2147483648
  %v1149 = vxor.u32 %v1091, 2147483648
  %v1150 = vxor.u32 %v1096, 2147483648
  %v1151 = vxor.u32 %v1101, 2147483648
  %v1152 = vxor.u32 %v1106, 2147483648
  %v1153 = vxor.u32 %v1111, 2147483648
  %v1154 = vxor.u32 %v1116, 2147483648
  %v1155 = vxor.u32 %v1121, 2147483648
  %v1156 = vmul.f32 %v1124, 1.442695
  %v1157 = vpow.pop %v1156
  %v1158 = vmul.f32 %v1125, 1.442695
  %v1159 = vpow.pop %v1158
  %v1160 = vmul.f32 %v1126, 1.442695
  %v1161 = vpow.pop %v1160
  %v1162 = vmul.f32 %v1127, 1.442695
  %v1163 = vpow.pop %v1162
  %v1164 = vmul.f32 %v1128, 1.442695
  %v1165 = vpow.pop %v1164
  %v1166 = vmul.f32 %v1129, 1.442695
  %v1167 = vpow.pop %v1166
  %v1168 = vmul.f32 %v1130, 1.442695
  %v1169 = vpow.pop %v1168
  %v1170 = vmul.f32 %v1131, 1.442695
  %v1171 = vpow.pop %v1170
  %v1172 = vmul.f32 %v1132, 1.442695
  %v1173 = vpow.pop %v1172
  %v1174 = vmul.f32 %v1133, 1.442695
  %v1175 = vpow.pop %v1174
  %v1176 = vmul.f32 %v1134, 1.442695
  %v1177 = vpow.pop %v1176
  %v1178 = vmul.f32 %v1135, 1.442695
  %v1179 = vpow.pop %v1178
  %v1180 = vmul.f32 %v1136, 1.442695
  %v1181 = vpow.pop %v1180
  %v1182 = vmul.f32 %v1137, 1.442695
  %v1183 = vpow.pop %v1182
  %v1184 = vmul.f32 %v1138, 1.442695
  %v1185 = vpow.pop %v1184
  %v1186 = vmul.f32 %v1139, 1.442695
  %v1187 = vpow.pop %v1186
  %v1188 = vmul.f32 %v1140, 1.442695
  %v1189 = vpow.pop %v1188
  %v1190 = vmul.f32 %v1141, 1.442695
  %v1191 = vpow.pop %v1190
  %v1192 = vmul.f32 %v1142, 1.442695
  %v1193 = vpow.pop %v1192
  %v1194 = vmul.f32 %v1143, 1.442695
  %v1195 = vpow.pop %v1194
  %v1196 = vmul.f32 %v1144, 1.442695
  %v1197 = vpow.pop %v1196
  %v1198 = vmul.f32 %v1145, 1.442695
  %v1199 = vpow.pop %v1198
  %v1200 = vmul.f32 %v1146, 1.442695
  %v1201 = vpow.pop %v1200
  %v1202 = vmul.f32 %v1147, 1.442695
  %v1203 = vpow.pop %v1202
  %v1204 = vmul.f32 %v1148, 1.442695
  %v1205 = vpow.pop %v1204
  %v1206 = vmul.f32 %v1149, 1.442695
  %v1207 = vpow.pop %v1206
  %v1208 = vmul.f32 %v1150, 1.442695
  %v1209 = vpow.pop %v1208
  %v1210 = vmul.f32 %v1151, 1.442695
  %v1211 = vpow.pop %v1210
  %v1212 = vmul.f32 %v1152, 1.442695
  %v1213 = vpow.pop %v1212
  %v1214 = vmul.f32 %v1153, 1.442695
  %v1215 = vpow.pop %v1214
  %v1216 = vmul.f32 %v1154, 1.442695
  %v1217 = vpow.pop %v1216
  %v1218 = vmul.f32 %v1155, 1.442695
  %v1219 = vpow.pop %v1218
  %v1220 = vadd.f32 %v1157, 1.0
  %v1221 = vadd.f32 %v1159, 1.0
  %v1222 = vadd.f32 %v1161, 1.0
  %v1223 = vadd.f32 %v1163, 1.0
  %v1224 = vadd.f32 %v1165, 1.0
  %v1225 = vadd.f32 %v1167, 1.0
  %v1226 = vadd.f32 %v1169, 1.0
  %v1227 = vadd.f32 %v1171, 1.0
  %v1228 = vadd.f32 %v1173, 1.0
  %v1229 = vadd.f32 %v1175, 1.0
  %v1230 = vadd.f32 %v1177, 1.0
  %v1231 = vadd.f32 %v1179, 1.0
  %v1232 = vadd.f32 %v1181, 1.0
  %v1233 = vadd.f32 %v1183, 1.0
  %v1234 = vadd.f32 %v1185, 1.0
  %v1235 = vadd.f32 %v1187, 1.0
  %v1236 = vadd.f32 %v1189, 1.0
  %v1237 = vadd.f32 %v1191, 1.0
  %v1238 = vadd.f32 %v1193, 1.0
  %v1239 = vadd.f32 %v1195, 1.0
  %v1240 = vadd.f32 %v1197, 1.0
  %v1241 = vadd.f32 %v1199, 1.0
  %v1242 = vadd.f32 %v1201, 1.0
  %v1243 = vadd.f32 %v1203, 1.0
  %v1244 = vadd.f32 %v1205, 1.0
  %v1245 = vadd.f32 %v1207, 1.0
  %v1246 = vadd.f32 %v1209, 1.0
  %v1247 = vadd.f32 %v1211, 1.0
  %v1248 = vadd.f32 %v1213, 1.0
  %v1249 = vadd.f32 %v1215, 1.0
  %v1250 = vadd.f32 %v1217, 1.0
  %v1251 = vadd.f32 %v1219, 1.0
  %v1252 = vrcp.pop %v1220
  %v1253 = vmul.f32 1.0, %v1252
  %v1254 = vrcp.pop %v1221
  %v1255 = vmul.f32 1.0, %v1254
  %v1256 = vrcp.pop %v1222
  %v1257 = vmul.f32 1.0, %v1256
  %v1258 = vrcp.pop %v1223
  %v1259 = vmul.f32 1.0, %v1258
  %v1260 = vrcp.pop %v1224
  %v1261 = vmul.f32 1.0, %v1260
  %v1262 = vrcp.pop %v1225
  %v1263 = vmul.f32 1.0, %v1262
  %v1264 = vrcp.pop %v1226
  %v1265 = vmul.f32 1.0, %v1264
  %v1266 = vrcp.pop %v1227
  %v1267 = vmul.f32 1.0, %v1266
  %v1268 = vrcp.pop %v1228
  %v1269 = vmul.f32 1.0, %v1268
  %v1270 = vrcp.pop %v1229
  %v1271 = vmul.f32 1.0, %v1270
  %v1272 = vrcp.pop %v1230
  %v1273 = vmul.f32 1.0, %v1272
  %v1274 = vrcp.pop %v1231
  %v1275 = vmul.f32 1.0, %v1274
  %v1276 = vrcp.pop %v1232
  %v1277 = vmul.f32 1.0, %v1276
  %v1278 = vrcp.pop %v1233
  %v1279 = vmul.f32 1.0, %v1278
  %v1280 = vrcp.pop %v1234
  %v1281 = vmul.f32 1.0, %v1280
  %v1282 = vrcp.pop %v1235
  %v1283 = vmul.f32 1.0, %v1282
  %v1284 = vrcp.pop %v1236
  %v1285 = vmul.f32 1.0, %v1284
  %v1286 = vrcp.pop %v1237
  %v1287 = vmul.f32 1.0, %v1286
  %v1288 = vrcp.pop %v1238
  %v1289 = vmul.f32 1.0, %v1288
  %v1290 = vrcp.pop %v1239
  %v1291 = vmul.f32 1.0, %v1290
  %v1292 = vrcp.pop %v1240
  %v1293 = vmul.f32 1.0, %v1292
  %v1294 = vrcp.pop %v1241
  %v1295 = vmul.f32 1.0, %v1294
  %v1296 = vrcp.pop %v1242
  %v1297 = vmul.f32 1.0, %v1296
  %v1298 = vrcp.pop %v1243
  %v1299 = vmul.f32 1.0, %v1298
  %v1300 = vrcp.pop %v1244
  %v1301 = vmul.f32 1.0, %v1300
  %v1302 = vrcp.pop %v1245
  %v1303 = vmul.f32 1.0, %v1302
  %v1304 = vrcp.pop %v1246
  %v1305 = vmul.f32 1.0, %v1304
  %v1306 = vrcp.pop %v1247
  %v1307 = vmul.f32 1.0, %v1306
  %v1308 = vrcp.pop %v1248
  %v1309 = vmul.f32 1.0, %v1308
  %v1310 = vrcp.pop %v1249
  %v1311 = vmul.f32 1.0, %v1310
  %v1312 = vrcp.pop %v1250
  %v1313 = vmul.f32 1.0, %v1312
  %v1314 = vrcp.pop %v1251
  %v1315 = vmul.f32 1.0, %v1314
  %vm1316 = vcmask 130048
  %1317 = vst.msk [vmem:[%s7] sm:$0xff] %vm1316, %v1253
  %1318 = vst.msk [vmem:[%s7 + $0x8] sm:$0xff] %vm1316, %v1255
  %1319 = vst.msk [vmem:[%s7 + $0x10] sm:$0xff] %vm1316, %v1257
  %1320 = vst.msk [vmem:[%s7 + $0x18] sm:$0xff] %vm1316, %v1259
  %1321 = vst.msk [vmem:[%s7 + $0x20] sm:$0xff] %vm1316, %v1261
  %1322 = vst.msk [vmem:[%s7 + $0x28] sm:$0xff] %vm1316, %v1263
  %1323 = vst.msk [vmem:[%s7 + $0x30] sm:$0xff] %vm1316, %v1265
  %1324 = vst.msk [vmem:[%s7 + $0x38] sm:$0xff] %vm1316, %v1267
  %1325 = vst.msk [vmem:[%s7 + $0x40] sm:$0xff] %vm1316, %v1269
  %1326 = vst.msk [vmem:[%s7 + $0x48] sm:$0xff] %vm1316, %v1271
  %1327 = vst.msk [vmem:[%s7 + $0x50] sm:$0xff] %vm1316, %v1273
  %1328 = vst.msk [vmem:[%s7 + $0x58] sm:$0xff] %vm1316, %v1275
  %1329 = vst.msk [vmem:[%s7 + $0x60] sm:$0xff] %vm1316, %v1277
  %1330 = vst.msk [vmem:[%s7 + $0x68] sm:$0xff] %vm1316, %v1279
  %1331 = vst.msk [vmem:[%s7 + $0x70] sm:$0xff] %vm1316, %v1281
  %1332 = vst.msk [vmem:[%s7 + $0x78] sm:$0xff] %vm1316, %v1283
  %1333 = vst.msk [vmem:[%s7 + $0x80] sm:$0xff] %vm1316, %v1285
  %1334 = vst.msk [vmem:[%s7 + $0x88] sm:$0xff] %vm1316, %v1287
  %1335 = vst.msk [vmem:[%s7 + $0x90] sm:$0xff] %vm1316, %v1289
  %1336 = vst.msk [vmem:[%s7 + $0x98] sm:$0xff] %vm1316, %v1291
  %1337 = vst.msk [vmem:[%s7 + $0xa0] sm:$0xff] %vm1316, %v1293
  %1338 = vst.msk [vmem:[%s7 + $0xa8] sm:$0xff] %vm1316, %v1295
  %1339 = vst.msk [vmem:[%s7 + $0xb0] sm:$0xff] %vm1316, %v1297
  %1340 = vst.msk [vmem:[%s7 + $0xb8] sm:$0xff] %vm1316, %v1299
  %1341 = vst.msk [vmem:[%s7 + $0xc0] sm:$0xff] %vm1316, %v1301
  %1342 = vst.msk [vmem:[%s7 + $0xc8] sm:$0xff] %vm1316, %v1303
  %1343 = vst.msk [vmem:[%s7 + $0xd0] sm:$0xff] %vm1316, %v1305
  %1344 = vst.msk [vmem:[%s7 + $0xd8] sm:$0xff] %vm1316, %v1307
  %1345 = vst.msk [vmem:[%s7 + $0xe0] sm:$0xff] %vm1316, %v1309
  %1346 = vst.msk [vmem:[%s7 + $0xe8] sm:$0xff] %vm1316, %v1311
  %1347 = vst.msk [vmem:[%s7 + $0xf0] sm:$0xff] %vm1316, %v1313
  %1348 = vst.msk [vmem:[%s7 + $0xf8] sm:$0xff] %vm1316, %v1315
  // Predicated region
  $region30: #{tpu_custom_call.1} parent=0 // pred_check
    _
  $region31: #{tpu_custom_call.1} parent=0 // pred_check_branch
    %1350 = sbr.rel (0) target = $region33
  $region32: #{tpu_custom_call.1} parent=0 // pred_region
    _
  $region33: #{tpu_custom_call.1} parent=0 // pred_fallthru
    _
  // Predicated region
  $region34: #{tpu_custom_call.1} parent=0 // pred_check
    _
  $region35: #{tpu_custom_call.1} parent=0 // pred_check_branch
    %1352 = sbr.rel (0) target = $region37
  $region36: #{tpu_custom_call.1} parent=0 // pred_region
    _
  $region37: #{tpu_custom_call.1} parent=0 // pred_fallthru
    _

</llo_original>
